<compile_context>
chip_gen: v6e
topology: v6e:2x2x1
jax: 0.10.0
libtpu: 0.0.40
codegen_flags: <defaults>
</compile_context>

<pallas_src>
import functools
import math

import jax
import jax.numpy as jnp
from jax.experimental import pallas as pl
from jax.experimental.pallas import tpu as pltpu


def build_sinusoidal_table(n_hid: int, max_len: int) -> jnp.ndarray:
    """Replicates the nn.Embedding weight initialization in __init__."""
    position = jnp.arange(0.0, max_len, dtype=jnp.float32)[:, None]            # (L, 1)
    div_term = jnp.exp(
        jnp.arange(0, n_hid, 2, dtype=jnp.float32) * -(math.log(10000.0) / n_hid)
    )                                                                           # (ceil(H/2),)
    scale = 1.0 / math.sqrt(n_hid)
    sin_part = jnp.sin(position * div_term) * scale                             # (L, ceil(H/2))
    cos_part = jnp.cos(position * div_term) * scale
    if n_hid % 2 == 1:
        cos_part = cos_part[:, :-1]
    emb = jnp.zeros((max_len, n_hid), dtype=jnp.float32)
    emb = emb.at[:, 0::2].set(sin_part)
    emb = emb.at[:, 1::2].set(cos_part)
    return emb


# --------------------------------------------------------------------------- #
# Kernel bodies (three variants, selected by the wrapper)
# --------------------------------------------------------------------------- #

def _te_kernel_flat(x_ref, e_ref, wtw_ref, bw_ref, o_ref):
    # Lane-dense path (H < 128).
    # x_ref  : (tn, S*H)   flattened (seq, hidden) tile -- full-lane stores
    # e_ref  : (tn, H)     gathered sinusoidal rows for this tile
    # wtw_ref: (H, S*H)    W.T tiled S times along its output dim
    # bw_ref : (1, S*H)    bias tiled S times
    pe_wide = jnp.dot(e_ref[...], wtw_ref[...], preferred_element_type=jnp.float32)
    pe_wide = pe_wide + bw_ref[...]
    o_ref[...] = (x_ref[...] + pe_wide).astype(o_ref.dtype)


def _te_kernel_3d_matmul(x_ref, e_ref, wt_ref, b_ref, o_ref):
    # 3-D path with the Linear fused in-kernel (H >= 128, W small enough for VMEM).
    pe = jnp.dot(e_ref[...], wt_ref[...], preferred_element_type=jnp.float32)
    pe = pe + b_ref[...]
    o_ref[...] = (x_ref[...] + pe[:, None, :]).astype(o_ref.dtype)


def _te_kernel_3d_pe(x_ref, pe_ref, o_ref):
    # 3-D path with pe precomputed outside (large H: keep the HxH weight out of VMEM).
    pe = pe_ref[...].astype(jnp.float32)
    o_ref[...] = (x_ref[...] + pe[:, None, :]).astype(o_ref.dtype)


# --------------------------------------------------------------------------- #
# Wrapper
# --------------------------------------------------------------------------- #

def _pick_tn(N, S, H, itemsize, target_block_bytes):
    """Largest batch tile (preferring a multiple of 8) that divides N and keeps
    one x block around `target_block_bytes`."""
    row_bytes = max(1, S * H * itemsize)
    cap = min(N, max(1, target_block_bytes // row_bytes))
    best, best8 = 1, None
    d = 1
    while d <= cap:
        if N % d == 0:
            best = d
            if d % 8 == 0:
                best8 = d
        d += 1
    return best8 if best8 is not None else best


def temporal_encoding(x, t, emb_table, w, b, *, tn=None,
                      target_block_bytes=1 << 20,
                      lane_dense=None, precompute_pe=None,
                      donate_x=False):
    """x: (N, S, H), t: (N,) int, emb_table: (max_len, H), w: (H, H) [out,in], b: (H,)."""
    N, S, H = x.shape
    itemsize = jnp.dtype(x.dtype).itemsize

    if tn is None:
        tn = _pick_tn(N, S, H, itemsize, target_block_bytes)
    assert N % tn == 0, "tn must divide the batch dimension N"
    grid = (N // tn,)

    # Heuristics (overridable): lane-dense flattening only helps when H < 128;
    # keep the widened weight small.  Precompute pe when the HxH weight would
    # eat a large chunk of VMEM (matters most on v7x's 64 MiB).
    if lane_dense is None:
        lane_dense = (H < 128) and (H * S * H * 4 <= (2 << 20))
    if precompute_pe is None:
        precompute_pe = (H * H * 4) > (4 << 20)

    # Embedding row gather -- tiny ((N, H) vs the (N, S, H) stream), kept in XLA.
    # Note: jnp.take clamps out-of-range t (PyTorch nn.Embedding would error).
    # TODO(synk): could be fused via PrefetchScalarGridSpec + pl.Element row
    #             gather, but that forces 1-row blocks; not worth it here.
    e = jnp.take(emb_table, t.astype(jnp.int32), axis=0).astype(jnp.float32)    # (N, H)

    io_aliases = {0: 0} if donate_x else {}
    cparams = pltpu.CompilerParams(dimension_semantics=("parallel",))

    if lane_dense:
        # Flatten (S, H) -> S*H (free: identical row-major layout) so stores are
        # full-lane even for H < 128.  Fold the seq replication of pe into the
        # matmul by widening W.T / b -- no cross-lane shuffles in-kernel.
        x2 = x.reshape(N, S * H)
        wt_wide = jnp.tile(w.T.astype(jnp.float32), (1, S))                      # (H, S*H)
        b_wide = jnp.tile(b.astype(jnp.float32), S)[None, :]                     # (1, S*H)
        x_spec = pl.BlockSpec((tn, S * H), lambda i: (i, 0))
        out2 = pl.pallas_call(
            _te_kernel_flat,
            out_shape=jax.ShapeDtypeStruct((N, S * H), x.dtype),
            grid_spec=pltpu.PrefetchScalarGridSpec(
                num_scalar_prefetch=0,
                grid=grid,
                in_specs=[
                    x_spec,
                    pl.BlockSpec((tn, H), lambda i: (i, 0)),
                    pl.BlockSpec((H, S * H), lambda i: (0, 0)),
                    pl.BlockSpec((1, S * H), lambda i: (0, 0)),
                ],
                out_specs=x_spec,
            ),
            compiler_params=cparams,
            input_output_aliases=io_aliases,
        )(x2, e, wt_wide, b_wide)
        return out2.reshape(N, S, H)

    x_spec = pl.BlockSpec((tn, S, H), lambda i: (i, 0, 0))
    if precompute_pe:
        # Large H: do the tiny (N, H) matmul in XLA so the HxH weight never
        # occupies VMEM; spend VMEM on the streaming x/out tiles instead.
        pe = (e @ w.T.astype(jnp.float32) + b.astype(jnp.float32)[None, :])      # (N, H)
        return pl.pallas_call(
            _te_kernel_3d_pe,
            out_shape=jax.ShapeDtypeStruct((N, S, H), x.dtype),
            grid_spec=pltpu.PrefetchScalarGridSpec(
                num_scalar_prefetch=0,
                grid=grid,
                in_specs=[
                    x_spec,
                    pl.BlockSpec((tn, H), lambda i: (i, 0)),
                ],
                out_specs=x_spec,
            ),
            compiler_params=cparams,
            input_output_aliases=io_aliases,
        )(x, pe)

    return pl.pallas_call(
        _te_kernel_3d_matmul,
        out_shape=jax.ShapeDtypeStruct((N, S, H), x.dtype),
        grid_spec=pltpu.PrefetchScalarGridSpec(
            num_scalar_prefetch=0,
            grid=grid,
            in_specs=[
                x_spec,
                pl.BlockSpec((tn, H), lambda i: (i, 0)),
                pl.BlockSpec((H, H), lambda i: (0, 0)),
                pl.BlockSpec((1, H), lambda i: (0, 0)),
            ],
            out_specs=x_spec,
        ),
        compiler_params=cparams,
        input_output_aliases=io_aliases,
    )(x, e, w.T.astype(jnp.float32), b.astype(jnp.float32)[None, :])


def temporal_encoding_ref(x, t, emb_table, w, b):
    e = jnp.take(emb_table, t.astype(jnp.int32), axis=0)
    pe = e @ w.T + b
    return x + pe[:, None, :]


if __name__ == "__main__":
    n_hid = 32
    max_len = 64
    N, S = 64, 4

    key = jax.random.PRNGKey(0)
    kx, kt, kw, kb = jax.random.split(key, 4)

    x = jax.random.normal(kx, (N, S, n_hid), dtype=jnp.float32)
    t = jax.random.randint(kt, (N,), 0, max_len, dtype=jnp.int32)

    # nn.Linear(n_hid, n_hid) shapes: W (H, H) [out, in], b (H,)
    bound = 1.0 / math.sqrt(n_hid)
    w = jax.random.uniform(kw, (n_hid, n_hid), minval=-bound, maxval=bound, dtype=jnp.float32)
    b = jax.random.uniform(kb, (n_hid,), minval=-bound, maxval=bound, dtype=jnp.float32)

    emb_table = build_sinusoidal_table(n_hid, max_len)
    ref = temporal_encoding_ref(x, t, emb_table, w, b)

    # Path 1 (default for H<128): lane-dense flattened layout, matmul fused,
    # explicit tn=8 -> grid=(8,) exercises software pipelining / megacore sharding.
    out1 = jax.block_until_ready(temporal_encoding(x, t, emb_table, w, b, tn=8))
    assert out1.shape == (N, S, n_hid)
    assert jnp.allclose(out1, ref, atol=1e-5, rtol=1e-5), "mismatch (flat path)"

    # Path 2: 3-D layout with the Linear fused in-kernel (the H>=128 default).
    out2 = jax.block_until_ready(
        temporal_encoding(x, t, emb_table, w, b, tn=16, lane_dense=False))
    assert jnp.allclose(out2, ref, atol=1e-5, rtol=1e-5), "mismatch (3d matmul path)"

    # Path 3: 3-D layout with pe precomputed outside (the large-H default),
    # VMEM-budgeted auto tn.
    out3 = jax.block_until_ready(
        temporal_encoding(x, t, emb_table, w, b, lane_dense=False, precompute_pe=True))
    assert jnp.allclose(out3, ref, atol=1e-5, rtol=1e-5), "mismatch (precomputed-pe path)"

    print("KERNEL_OK")
</pallas_src>

<mosaic_0001>
module attributes {stable_mosaic.version = 11 : i64} {
  func.func @_te_kernel_flat(%arg0: i32, %arg1: memref<8x128xf32, #tpu.memory_space<vmem>>, %arg2: memref<8x32xf32, #tpu.memory_space<vmem>>, %arg3: memref<32x128xf32, #tpu.memory_space<vmem>>, %arg4: memref<1x128xf32, #tpu.memory_space<vmem>>, %arg5: memref<8x128xf32, #tpu.memory_space<vmem>>) attributes {dimension_semantics = [#tpu.dimension_semantics<parallel>], iteration_bounds = array<i64: 8>, scalar_prefetch = 0 : i64, scratch_operands = 0 : i64, tpu.core_type = #tpu.core_type<tc>, window_params = [{transform_indices = @transform_0, window_bounds = array<i64: 8, 128>}, {transform_indices = @transform_1, window_bounds = array<i64: 8, 32>}, {pipeline_mode = #tpu.pipeline_mode<synchronous>, transform_indices = @transform_2, window_bounds = array<i64: 32, 128>}, {pipeline_mode = #tpu.pipeline_mode<synchronous>, transform_indices = @transform_3, window_bounds = array<i64: 1, 128>}, {transform_indices = @transform_4, window_bounds = array<i64: 8, 128>}]} {
    %c0 = arith.constant 0 : index
    %c0_0 = arith.constant 0 : index
    %0 = vector.load %arg2[%c0, %c0_0] : memref<8x32xf32, #tpu.memory_space<vmem>>, vector<8x32xf32>
    %c0_1 = arith.constant 0 : index
    %c0_2 = arith.constant 0 : index
    %1 = vector.load %arg3[%c0_1, %c0_2] : memref<32x128xf32, #tpu.memory_space<vmem>>, vector<32x128xf32>
    %cst = arith.constant dense<0.000000e+00> : vector<8x128xf32>
    %2 = tpu.matmul %0, %1, %cst {dimension_numbers = #tpu.dot_dimension_numbers<[1], [0], [0], [1], [0, 0, 1, 1], [], []>} : vector<8x32xf32>, vector<32x128xf32>, vector<8x128xf32> -> vector<8x128xf32>
    %c0_3 = arith.constant 0 : index
    %c0_4 = arith.constant 0 : index
    %3 = vector.load %arg4[%c0_3, %c0_4] : memref<1x128xf32, #tpu.memory_space<vmem>>, vector<1x128xf32>
    %4 = vector.broadcast %3 : vector<1x128xf32> to vector<8x128xf32>
    %5 = arith.addf %2, %4 : vector<8x128xf32>
    %c0_5 = arith.constant 0 : index
    %c0_6 = arith.constant 0 : index
    %6 = vector.load %arg1[%c0_5, %c0_6] : memref<8x128xf32, #tpu.memory_space<vmem>>, vector<8x128xf32>
    %7 = arith.addf %6, %5 : vector<8x128xf32>
    %c0_7 = arith.constant 0 : index
    %c0_8 = arith.constant 0 : index
    %8 = vector.load %arg5[%c0_7, %c0_8] : memref<8x128xf32, #tpu.memory_space<vmem>>, vector<8x128xf32>
    tpu.vector_store %arg5[%c0_7, %c0_8], %7 {strides = array<i32>} : memref<8x128xf32, #tpu.memory_space<vmem>>, vector<8x128xf32>,
    return
  }
  func.func @transform_0(%arg0: i32) -> (i32, i32) {
    %c0_i32 = arith.constant 0 : i32
    %c0_i32_0 = arith.constant 0 : i32
    return %arg0, %c0_i32 : i32, i32
  }
  func.func @transform_1(%arg0: i32) -> (i32, i32) {
    %c0_i32 = arith.constant 0 : i32
    %c0_i32_0 = arith.constant 0 : i32
    return %arg0, %c0_i32 : i32, i32
  }
  func.func @transform_2(%arg0: i32) -> (i32, i32) {
    %c0_i32 = arith.constant 0 : i32
    %c0_i32_0 = arith.constant 0 : i32
    %c0_i32_1 = arith.constant 0 : i32
    return %c0_i32, %c0_i32_0 : i32, i32
  }
  func.func @transform_3(%arg0: i32) -> (i32, i32) {
    %c0_i32 = arith.constant 0 : i32
    %c0_i32_0 = arith.constant 0 : i32
    %c0_i32_1 = arith.constant 0 : i32
    return %c0_i32, %c0_i32_0 : i32, i32
  }
  func.func @transform_4(%arg0: i32) -> (i32, i32) {
    %c0_i32 = arith.constant 0 : i32
    %c0_i32_0 = arith.constant 0 : i32
    return %arg0, %c0_i32 : i32, i32
  }
}

</mosaic_0001>

<llo_original>
// kernel: tpu_custom_call.1
$region0: #{tpu_custom_call.1}
  #allocation0 [shape = 'u32[]', space=smem, size = 0x4, offset = 0x4, fixed_abs, tag = 'smem constant byte address 0x4 - core index']
  #allocation1 [shape = 'u32[144,128]{1,0:T(1,128)}', space=vmem, size = 0x12000, scoped, tag = 'internal scratch']
  %s0 = inlined_call_operand.vmem [shape: f32[64,128], index: 0, kind: input, shape index: {}]
  %s1 = inlined_call_operand.vmem [shape: f32[64,32], index: 1, kind: input, shape index: {}]
  %s2 = inlined_call_operand.vmem [shape: f32[32,128], index: 2, kind: input, shape index: {}]
  %s3 = inlined_call_operand.vmem [shape: f32[1,128], index: 3, kind: input, shape index: {}]
  %s4 = inlined_call_operand.hbm [shape: f32[64,128], index: 4, kind: output, shape index: {}]
  %s5 = sld [smem:[#allocation0]]
  $region49: #{tpu_custom_call.1} parent=0
    _
  %s7 = ssub.s32 1, %s5
  %s8 = scalar_select 0, %s7, %s5
  $region1: #{tpu_custom_call.1} parent=0
    #allocation2 [shape = 'u8[8192]{0}', space=vmem, size = 0x2000, scoped, tag = 'output window, operand 0']
    #allocation3 [shape = 's32[2]{0}', space=sflag, size = 0x8, scoped, tag = 'scoped memory for tpu_custom_call.1']
    %9 = vsyncpa [#allocation3], 0
    %s10 = scalar_lea.sflag [#allocation3], 1
    %11 = vsyncpa %s10, 0
    loop: start=0, step=1, limit=10
    $region2: #{tpu_custom_call.1} parent=1 // loop_pre_header
      _
    $region3: #{tpu_custom_call.1} parent=1 // loop_header
      %s13 = sphi 0, %s17
      %p14 = scmp.ge.s32.totalorder %s13, 10
      %s23 = sphi 0, %s25
      %s26 = sphi 0, %s23
      %s27 = sphi 0, %s26
      %s43 = sphi 0, %s27
      %s49 = sphi 0, %s51
      %s52 = sphi 0, %s49
      %s53 = sphi 0, %s52
      %s69 = sphi 0, %s53
      %s73 = sphi 0, %s73
      %s75 = sphi 0, %s73
      %s76 = sphi 0, %s75
      %s90 = sphi 0, %s76
      %s94 = sphi 0, %s94
      %s96 = sphi 0, %s94
      %s97 = sphi 0, %s96
      %s111 = sphi 0, %s97
      %s117 = sphi 0, %s119
      %s120 = sphi 0, %s117
      %s121 = sphi 0, %s120
      %s137 = sphi 0, %s121
    $region4: #{tpu_custom_call.1} parent=1 // loop_header_branch
      %16 = sbr.rel (%p14) target = $region8
    $region5: #{tpu_custom_call.1} parent=1 // loop_body
      %s18 = ssub.s32 %s13, 1
      %s19 = ssub.s32 %s13, 2
      %s20 = sadd.s32 %s13, 1
      %s21 = ssub.s32 %s13, %s20
      %p22 = scmp.eq.s32.totalorder %s21, 0
      %s24 = sadd.s32 %s23, 1
      %s25 = scalar_select %p22, %s23, %s24
      %p28 = pneg %p22
      %p29 = scmp.eq.s32.totalorder %s13, 7
      %p30 = por %p28, %p29
      %p31 = scmp.ne.s32.totalorder %s23, %s26
      %p32 = scmp.eq.s32.totalorder %s13, 0
      %p33 = por %p31, %p32
      %p34 = scmp.ne.s32.totalorder %s23, %s26
      %p35 = scmp.eq.s32.totalorder %s18, 7
      %p36 = por %p34, %p35
      %p37 = scmp.ne.s32.totalorder %s26, %s27
      %p38 = scmp.eq.s32.totalorder %s18, 0
      %p39 = por %p37, %p38
      %p40 = scmp.ne.s32.totalorder %s26, %s27
      %p41 = scmp.eq.s32.totalorder %s19, 7
      %p42 = por %p40, %p41
      %p44 = scmp.ne.s32.totalorder %s27, %s43
      %p45 = scmp.eq.s32.totalorder %s19, 0
      %p46 = por %p44, %p45
      %s47 = ssub.s32 %s13, %s20
      %p48 = scmp.eq.s32.totalorder %s47, 0
      %s50 = sadd.s32 %s49, 1
      %s51 = scalar_select %p48, %s49, %s50
      %p54 = pneg %p48
      %p55 = scmp.eq.s32.totalorder %s13, 7
      %p56 = por %p54, %p55
      %p57 = scmp.ne.s32.totalorder %s49, %s52
      %p58 = scmp.eq.s32.totalorder %s13, 0
      %p59 = por %p57, %p58
      %p60 = scmp.ne.s32.totalorder %s49, %s52
      %p61 = scmp.eq.s32.totalorder %s18, 7
      %p62 = por %p60, %p61
      %p63 = scmp.ne.s32.totalorder %s52, %s53
      %p64 = scmp.eq.s32.totalorder %s18, 0
      %p65 = por %p63, %p64
      %p66 = scmp.ne.s32.totalorder %s52, %s53
      %p67 = scmp.eq.s32.totalorder %s19, 7
      %p68 = por %p66, %p67
      %p70 = scmp.ne.s32.totalorder %s53, %s69
      %p71 = scmp.eq.s32.totalorder %s19, 0
      %p72 = por %p70, %p71
      %s74 = sadd.s32 %s73, 1
      %p77 = scmp.eq.s32.totalorder %s13, 7
      %p78 = scmp.ne.s32.totalorder %s73, %s75
      %p79 = scmp.eq.s32.totalorder %s13, 0
      %p80 = por %p78, %p79
      %p81 = scmp.ne.s32.totalorder %s73, %s75
      %p82 = scmp.eq.s32.totalorder %s18, 7
      %p83 = por %p81, %p82
      %p84 = scmp.ne.s32.totalorder %s75, %s76
      %p85 = scmp.eq.s32.totalorder %s18, 0
      %p86 = por %p84, %p85
      %p87 = scmp.ne.s32.totalorder %s75, %s76
      %p88 = scmp.eq.s32.totalorder %s19, 7
      %p89 = por %p87, %p88
      %p91 = scmp.ne.s32.totalorder %s76, %s90
      %p92 = scmp.eq.s32.totalorder %s19, 0
      %p93 = por %p91, %p92
      %s95 = sadd.s32 %s94, 1
      %p98 = scmp.eq.s32.totalorder %s13, 7
      %p99 = scmp.ne.s32.totalorder %s94, %s96
      %p100 = scmp.eq.s32.totalorder %s13, 0
      %p101 = por %p99, %p100
      %p102 = scmp.ne.s32.totalorder %s94, %s96
      %p103 = scmp.eq.s32.totalorder %s18, 7
      %p104 = por %p102, %p103
      %p105 = scmp.ne.s32.totalorder %s96, %s97
      %p106 = scmp.eq.s32.totalorder %s18, 0
      %p107 = por %p105, %p106
      %p108 = scmp.ne.s32.totalorder %s96, %s97
      %p109 = scmp.eq.s32.totalorder %s19, 7
      %p110 = por %p108, %p109
      %p112 = scmp.ne.s32.totalorder %s97, %s111
      %p113 = scmp.eq.s32.totalorder %s19, 0
      %p114 = por %p112, %p113
      %s115 = ssub.s32 %s13, %s20
      %p116 = scmp.eq.s32.totalorder %s115, 0
      %s118 = sadd.s32 %s117, 1
      %s119 = scalar_select %p116, %s117, %s118
      %p122 = pneg %p116
      %p123 = scmp.eq.s32.totalorder %s13, 7
      %p124 = por %p122, %p123
      %p125 = scmp.ne.s32.totalorder %s117, %s120
      %p126 = scmp.eq.s32.totalorder %s13, 0
      %p127 = por %p125, %p126
      %p128 = scmp.ne.s32.totalorder %s117, %s120
      %p129 = scmp.eq.s32.totalorder %s18, 7
      %p130 = por %p128, %p129
      %p131 = scmp.ne.s32.totalorder %s120, %s121
      %p132 = scmp.eq.s32.totalorder %s18, 0
      %p133 = por %p131, %p132
      %p134 = scmp.ne.s32.totalorder %s120, %s121
      %p135 = scmp.eq.s32.totalorder %s19, 7
      %p136 = por %p134, %p135
      %p138 = scmp.ne.s32.totalorder %s121, %s137
      %p139 = scmp.eq.s32.totalorder %s19, 0
      %p140 = por %p138, %p139
      %p141 = scmp.le.s32.totalorder 1, %s13
      %p142 = scmp.lt.s32.totalorder %s13, 9
      %p143 = pnand %p141, %p142
      %p144 = pneg %p143
      // Predicated region
      $region9: #{tpu_custom_call.1} parent=5 // pred_check
        _
      $region10: #{tpu_custom_call.1} parent=5 // pred_check_branch
        %146 = sbr.rel (%p143) target = $region12
      $region11: #{tpu_custom_call.1} parent=5 // pred_region
        %s147 = ssub.s32 %s13, 1
        // Predicated region
        $region13: #{tpu_custom_call.1} parent=11 // pred_check
          %p148 = pneg %p86
        $region14: #{tpu_custom_call.1} parent=11 // pred_check_branch
          %150 = sbr.rel (%p148) target = $region16
        $region15: #{tpu_custom_call.1} parent=11 // pred_region
          _
        $region16: #{tpu_custom_call.1} parent=11 // pred_fallthru
          _
        // Predicated region
        $region17: #{tpu_custom_call.1} parent=11 // pred_check
          %p151 = pneg %p107
        $region18: #{tpu_custom_call.1} parent=11 // pred_check_branch
          %153 = sbr.rel (%p151) target = $region20
        $region19: #{tpu_custom_call.1} parent=11 // pred_region
          _
        $region20: #{tpu_custom_call.1} parent=11 // pred_fallthru
          _
      $region12: #{tpu_custom_call.1} parent=5 // pred_fallthru
        _
      %p154 = scmp.lt.s32.totalorder %s13, 8
      // Predicated region
      $region21: #{tpu_custom_call.1} parent=5 // pred_check
        %p155 = pneg %p154
      $region22: #{tpu_custom_call.1} parent=5 // pred_check_branch
        %157 = sbr.rel (%p155) target = $region24
      $region23: #{tpu_custom_call.1} parent=5 // pred_region
        // Predicated region
        $region25: #{tpu_custom_call.1} parent=23 // pred_check
          %p158 = pneg %p33
        $region26: #{tpu_custom_call.1} parent=23 // pred_check_branch
          %160 = sbr.rel (%p158) target = $region28
        $region27: #{tpu_custom_call.1} parent=23 // pred_region
          %p161 = scmp.lt.s32.totalorder %s13, 7
          %s162 = scalar_select %p161, %s13, 7
          %s163 = smul.addr %s162, 8
          %s164 = scalar_lea.vmem %s0, %s163
        $region28: #{tpu_custom_call.1} parent=23 // pred_fallthru
          _
        // Predicated region
        $region29: #{tpu_custom_call.1} parent=23 // pred_check
          %p165 = pneg %p59
        $region30: #{tpu_custom_call.1} parent=23 // pred_check_branch
          %167 = sbr.rel (%p165) target = $region32
        $region31: #{tpu_custom_call.1} parent=23 // pred_region
          %p168 = scmp.lt.s32.totalorder %s13, 7
          %s169 = scalar_select %p168, %s13, 7
          %s170 = smul.addr %s169, 8
          %s171 = scalar_lea.vmem %s1, %s170
        $region32: #{tpu_custom_call.1} parent=23 // pred_fallthru
          _
      $region24: #{tpu_custom_call.1} parent=5 // pred_fallthru
        _
      %p172 = scmp.le.s32.totalorder 1, %s13
      %p173 = scmp.lt.s32.totalorder %s13, 9
      %p174 = pnand %p172, %p173
      %p175 = pneg %p174
      // Predicated region
      $region33: #{tpu_custom_call.1} parent=5 // pred_check
        _
      $region34: #{tpu_custom_call.1} parent=5 // pred_check_branch
        %177 = sbr.rel (%p174) target = $region36
      $region35: #{tpu_custom_call.1} parent=5 // pred_region
        %s178 = ssub.s32 %s13, 1
        %p179 = scmp.lt.s32.totalorder %s18, 7
        %s180 = scalar_select %p179, %s18, 7
        %s181 = smul.addr %s180, 8
        %s182 = scalar_lea.vmem %s0, %s181
        %p183 = pneg %p39
        %p184 = pneg %p36
        %p185 = scmp.lt.s32.totalorder %s18, 7
        %s186 = scalar_select %p185, %s18, 7
        %s187 = smul.addr %s186, 8
        %s188 = scalar_lea.vmem %s1, %s187
        %p189 = pneg %p65
        %p190 = pneg %p62
        %p191 = pneg %p86
        %p192 = pneg %p83
        %p193 = pneg %p107
        %p194 = pneg %p104
        %p195 = pneg %p133
        %p196 = pneg %p130
        %s197 = sand.u32 %s120, 1
        %s198 = scalar_lea.sflag [#allocation3], %s197
        %s199 = sand.u32 %s120, 1
        %s200 = smul.addr %s199, 8
        %s201 = scalar_lea.vmem [#allocation2], %s200
        %p202 = scmp.lt.s32.totalorder %s18, 7
        %s203 = scalar_select %p202, %s18, 7
        %s204 = smul.addr %s203, 8
        %s205 = scalar_lea.vmem %s0, %s204
        %p206 = scmp.lt.s32.totalorder %s18, 7
        %s207 = scalar_select %p206, %s18, 7
        %s208 = smul.addr %s207, 8
        %s209 = scalar_lea.vmem %s1, %s208
        %v210 = vld [vmem:[%s209] sm:$0xff]
        %v211 = vld [vmem:[%s2] sm:$0xff]
        %v212 = vld [vmem:[%s2 + $0x8] sm:$0xff]
        %v213 = vld [vmem:[%s2 + $0x10] sm:$0xff]
        %v214 = vld [vmem:[%s2 + $0x18] sm:$0xff]
        %v215 = vld [vmem:[%s3] sm:$0x1]
        %v217 = vlaneseq
        %v218 = vshrl.u32 %v217, 7
        %v219 = vsub.s32 0, %v218
        %v220 = vrot.slane %v215, %v219
        %vm222 = vcmask 261120
        %v224 = vsel %vm222, %v210, 0
        %226 = vmatprep.subr.mxu0 0.0
        %227 = vmatpush1.msra.mxu0 0.0
        %228 = vmatprep.subr.mxu0 0.0
        %229 = vmatpush1.msra.mxu0 0.0
        %230 = vmatprep.subr.mxu0 0.0
        %231 = vmatpush1.msra.mxu0 0.0
        %232 = vmatprep.subr.mxu0 0.0
        %233 = vmatpush1.msra.mxu0 0.0
        %234 = vmatprep.subr.mxu0 0.0
        %235 = vmatpush1.msra.mxu0 0.0
        %236 = vmatprep.subr.mxu0 0.0
        %237 = vmatpush1.msra.mxu0 0.0
        %238 = vmatprep.subr.mxu0 0.0
        %239 = vmatpush1.msra.mxu0 0.0
        %240 = vmatprep.subr.mxu0 0.0
        %241 = vmatpush1.msra.mxu0 0.0
        %242 = vmatprep.subr.mxu0 0.0
        %243 = vmatpush1.msra.mxu0 0.0
        %244 = vmatprep.subr.mxu0 0.0
        %245 = vmatpush1.msra.mxu0 0.0
        %246 = vmatprep.subr.mxu0 0.0
        %247 = vmatpush1.msra.mxu0 0.0
        %248 = vmatprep.subr.mxu0 0.0
        %249 = vmatpush1.msra.mxu0 0.0
        %250 = vmatprep.subr.mxu0 0.0
        %251 = vmatpush1.msra.mxu0 %v214
        %252 = vmatprep.subr.mxu0 0.0
        %253 = vmatpush1.msra.mxu0 %v213
        %254 = vmatprep.subr.mxu0 0.0
        %255 = vmatpush1.msra.mxu0 %v212
        %256 = vmatprep.subr.mxu0 0.0
        %257 = vmatpush1.msra.mxu0 %v211
        %258 = vmatprep.subr.mxu0 0.0
        %259 = vmatpush2.msra.mxu0 0.0
        %260 = vmatprep.subr.mxu0 0.0
        %261 = vmatpush2.msra.mxu0 0.0
        %262 = vmatprep.subr.mxu0 0.0
        %263 = vmatpush2.msra.mxu0 0.0
        %264 = vmatprep.subr.mxu0 0.0
        %265 = vmatpush2.msra.mxu0 0.0
        %266 = vmatprep.subr.mxu0 0.0
        %267 = vmatpush2.msra.mxu0 0.0
        %268 = vmatprep.subr.mxu0 0.0
        %269 = vmatpush2.msra.mxu0 0.0
        %270 = vmatprep.subr.mxu0 0.0
        %271 = vmatpush2.msra.mxu0 0.0
        %272 = vmatprep.subr.mxu0 0.0
        %273 = vmatpush2.msra.mxu0 0.0
        %274 = vmatprep.subr.mxu0 0.0
        %275 = vmatpush2.msra.mxu0 0.0
        %276 = vmatprep.subr.mxu0 0.0
        %277 = vmatpush2.msra.mxu0 0.0
        %278 = vmatprep.subr.mxu0 0.0
        %279 = vmatpush2.msra.mxu0 0.0
        %280 = vmatprep.subr.mxu0 0.0
        %281 = vmatpush2.msra.mxu0 0.0
        %282 = vmatprep.subr.mxu0 0.0
        %283 = vmatpush2.msra.mxu0 0.0
        %284 = vmatprep.subr.mxu0 0.0
        %285 = vmatpush2.msra.mxu0 0.0
        %286 = vmatprep.subr.mxu0 0.0
        %287 = vmatpush2.msra.mxu0 0.0
        %288 = vmatprep.subr.mxu0 0.0
        %289 = vmatpush2.msra.mxu0 0.0
        %290 = vmatprep.mubr.f32.mxu0 0.0
        %291 = vmatmul.mubr.f32.gmra.mxu0 %v224
        %v292 = vpop.f32.mrf.mxu0
        %v293 = vadd.f32 %v220, %v292
        %v294 = vpop.f32.mrf.mxu0
        %295 = vdwg.mxu0
        %v296 = vld [vmem:[%s205] sm:$0xff]
        %v297 = vadd.f32 %v296, %v293
        %298 = vst [vmem:[%s201] sm:$0xff] %v297
        %s299 = sand.u32 %s120, 1
        %s300 = scalar_lea.sflag [#allocation3], %s299
        %s301 = sand.u32 %s120, 1
        %s302 = smul.addr %s301, 8
        %s303 = scalar_lea.vmem [#allocation2], %s302
        // Predicated region
        $region37: #{tpu_custom_call.1} parent=35 // pred_check
          %p304 = pneg %p130
        $region38: #{tpu_custom_call.1} parent=35 // pred_check_branch
          %306 = sbr.rel (%p304) target = $region40
        $region39: #{tpu_custom_call.1} parent=35 // pred_region
          %s308 = ssub.s32 128, 128
          %309 = vsyncadd %s300, %s308
          %s310 = smul.addr %s18, 128
          %s311 = scalar_lea.hbm %s4, %s310
          %s313 = sshll.u32 %s303, 4
          %s314 = int_to_ptr.vmem [resolvable:$true] %s313
          %316 = dma.vmem_to_hbm [thread:$0]  %s314, 128, %s311, %s300
        $region40: #{tpu_custom_call.1} parent=35 // pred_fallthru
          _
      $region36: #{tpu_custom_call.1} parent=5 // pred_fallthru
        _
      %p317 = scmp.le.s32.totalorder 2, %s13
      // Predicated region
      $region41: #{tpu_custom_call.1} parent=5 // pred_check
        %p318 = pneg %p317
      $region42: #{tpu_custom_call.1} parent=5 // pred_check_branch
        %320 = sbr.rel (%p318) target = $region44
      $region43: #{tpu_custom_call.1} parent=5 // pred_region
        %s321 = ssub.s32 %s13, 2
        // Predicated region
        $region45: #{tpu_custom_call.1} parent=43 // pred_check
          %p322 = pneg %p136
        $region46: #{tpu_custom_call.1} parent=43 // pred_check_branch
          %324 = sbr.rel (%p322) target = $region48
        $region47: #{tpu_custom_call.1} parent=43 // pred_region
          %s325 = sand.u32 %s121, 1
          %s326 = scalar_lea.sflag [#allocation3], %s325
          %s327 = sand.u32 %s121, 1
          %s328 = smul.addr %s327, 8
          %s329 = scalar_lea.vmem [#allocation2], %s328
          %330 = dma.done %s326, 128
        $region48: #{tpu_custom_call.1} parent=43 // pred_fallthru
          _
      $region44: #{tpu_custom_call.1} parent=5 // pred_fallthru
        _
    $region6: #{tpu_custom_call.1} parent=1 // loop_footer
      %s17 = sadd.s32 1, %s13
    $region7: #{tpu_custom_call.1} parent=1 // loop_footer_branch
      %12 = sbr.rel target = $region3
    $region8: #{tpu_custom_call.1} parent=1 // loop_exit
      _
    %331 = vsyncpa [#allocation3], 1
    %s332 = scalar_lea.sflag [#allocation3], 1
    %333 = vsyncpa %s332, 1

</llo_original>
